<compile_context>
chip_gen: v6e
topology: v6e:2x2x1
jax: 0.10.0
libtpu: 0.0.40
codegen_flags: <defaults>
</compile_context>

<pallas_src>
import jax
import jax.numpy as jnp
from jax.experimental import pallas as pl
from jax.experimental.pallas import tpu as pltpu


HIDDEN = 128
_SUBLANE = 16            # bf16 sublane packing -> tile_b multiples of 16
_MAX_TILE_B = 2048       # absolute cap on rows per grid step
_MIN_TILE_B = 16
_SPLIT_MIN_B = 256       # force >= 2 grid steps above this batch size


def _round_up(n, m):
    return ((n + m - 1) // m) * m


def _vmem_capacity_bytes():
    try:
        return int(pltpu.get_tpu_info().vmem_capacity_bytes)
    except Exception:
        return 64 * 2**20    # conservative fallback (v7x per-TC VMEM)


def _mlp_kernel(x_ref,
                w1_ref, b1_ref,
                w2_ref, b2_ref,
                w3_ref, b3_ref,
                w4_ref, b4_ref,
                w5_ref, b5_ref,
                o_ref):
    """One batch tile of the whole MLP: 5 MXU matmuls + ReLU + sigmoid in VMEM."""

    def dense(h_bf16, w_ref, b_ref):
        # bf16 operands on the MXU, f32 accumulation, f32 bias broadcast.
        return jnp.dot(h_bf16, w_ref[...],
                       preferred_element_type=jnp.float32) + b_ref[...]

    def relu_bf16(h_f32):
        # Elementwise in f32 (v5e VPU has no bf16 path); re-pack to bf16 only
        # as the next matmul operand.
        return jnp.maximum(h_f32, 0.0).astype(jnp.bfloat16)

    # f32 rows stream straight from HBM; the bf16 cast is fused here instead of
    # a separate wrapper-side XLA pass over x.
    h = x_ref[...].astype(jnp.bfloat16)                 # (tile_b, in_dim)
    h = relu_bf16(dense(h, w1_ref, b1_ref))
    h = relu_bf16(dense(h, w2_ref, b2_ref))
    h = relu_bf16(dense(h, w3_ref, b3_ref))
    h = relu_bf16(dense(h, w4_ref, b4_ref))
    z = dense(h, w5_ref, b5_ref)                        # (tile_b, out_pad) f32
    # Sigmoid: exp and approximate reciprocal both land on the EUP slot.
    # exp(-z) -> +inf for very negative z still yields the correct 0.0 limit.
    s = pl.reciprocal(1.0 + jnp.exp(-z), approx=True)
    o_ref[...] = s.astype(jnp.bfloat16)                 # bf16 writeback


def _pick_tile_b(b, in_dim, out_pad, weight_bytes):
    """Rows per grid step, derived from the chip's VMEM budget."""
    vmem_cap = _vmem_capacity_bytes()
    # Per-row VMEM: double-buffered f32 x tile + double-buffered bf16 out tile
    # + f32 intermediates headroom. Resident weights are double-buffered by the
    # default pipeline, hence 2x.
    per_row = 2 * in_dim * 4 + 2 * out_pad * 2 + 8 * HIDDEN * 4
    budget = int(0.6 * vmem_cap) - 2 * weight_bytes
    tile = budget // per_row if budget > 0 else _MIN_TILE_B
    tile = max(_MIN_TILE_B, min(int(tile), _MAX_TILE_B))
    tile = max(_MIN_TILE_B, (tile // _SUBLANE) * _SUBLANE)
    if b >= _SPLIT_MIN_B:
        # >= 2 grid steps: shards the "parallel" batch axis across both v7x
        # TensorCores; on 1-TC chips it just adds DMA/compute overlap.
        tile = min(tile, _round_up(-(-b // 2), _SUBLANE))
    if tile >= b:
        tile = b           # single block == full batch extent (always legal)
    return tile


@jax.jit
def neural_network_max_util_forward(x, params):
    """x: (B, ...) array (e.g. NCHW); params: 5 (W, b) pairs, W stored (in, out)."""
    b = x.shape[0]
    x2d = x.reshape(b, -1)                          # nn.Flatten(); stays f32
    in_dim = x2d.shape[1]

    (w1, b1), (w2, b2), (w3, b3), (w4, b4), (w5, b5) = params
    out_dim = w5.shape[1]
    out_pad = _round_up(out_dim, 128)               # lane-dense output stores

    # Zero-pad the final layer so the kernel's output tile is a 128-multiple.
    w5p = jnp.pad(w5, ((0, 0), (0, out_pad - out_dim)))
    b5p = jnp.pad(b5, ((0, out_pad - out_dim),))

    weights = [w.astype(jnp.bfloat16) for w in (w1, w2, w3, w4, w5p)]
    biases = [v.astype(jnp.float32).reshape(1, -1) for v in (b1, b2, b3, b4, b5p)]
    weight_bytes = sum(int(a.size) * a.dtype.itemsize for a in weights + biases)

    # TODO(synk): single-buffer the resident weights (pl.Buffered(1)) and K-tile
    # the first layer once input_dim grows so large that w1 no longer fits the
    # per-core VMEM budget (v7x: 64 MiB).
    tile_b = _pick_tile_b(b, in_dim, out_pad, weight_bytes)
    grid = (pl.cdiv(b, tile_b),)                    # last block may be ragged

    x_spec = pl.BlockSpec((tile_b, in_dim), lambda i: (i, 0))
    out_spec = pl.BlockSpec((tile_b, out_pad), lambda i: (i, 0))

    def resident(shape):
        # Constant index map -> block stays VMEM-resident across grid steps.
        return pl.BlockSpec(shape, lambda i: (0, 0))

    in_specs = [x_spec]
    flat_args = [x2d]
    for w, v in zip(weights, biases):
        in_specs += [resident(w.shape), resident(v.shape)]
        flat_args += [w, v]

    flops = 2 * b * (in_dim * HIDDEN + 3 * HIDDEN * HIDDEN + HIDDEN * out_pad)
    bytes_accessed = b * in_dim * 4 + weight_bytes + b * out_pad * 2
    vmem_limit = int(0.75 * _vmem_capacity_bytes())

    out = pl.pallas_call(
        _mlp_kernel,
        out_shape=jax.ShapeDtypeStruct((b, out_pad), jnp.bfloat16),
        grid=grid,
        in_specs=in_specs,
        out_specs=out_spec,
        compiler_params=pltpu.CompilerParams(
            dimension_semantics=("parallel",),      # megacore sharding on v7x
            vmem_limit_bytes=vmem_limit),
        cost_estimate=pl.CostEstimate(
            flops=flops,
            transcendentals=b * out_pad,
            bytes_accessed=bytes_accessed),
    )(*flat_args)

    # Drop the lane padding of the final layer; return f32 like the nn.Module.
    return out[:, :out_dim].astype(jnp.float32)


def init_params(key, input_dim, output_dim):
    """PyTorch-nn.Linear-like init; weights stored (in, out) so kernel does x @ W + b."""
    dims = [(input_dim, HIDDEN), (HIDDEN, HIDDEN), (HIDDEN, HIDDEN),
            (HIDDEN, HIDDEN), (HIDDEN, output_dim)]
    params = []
    for (fan_in, fan_out) in dims:
        key, kw, kb = jax.random.split(key, 3)
        bound = 1.0 / (fan_in ** 0.5)
        w = jax.random.uniform(kw, (fan_in, fan_out), jnp.float32, -bound, bound)
        bvec = jax.random.uniform(kb, (fan_out,), jnp.float32, -bound, bound)
        params.append((w, bvec))
    return params


if __name__ == "__main__":
    key = jax.random.PRNGKey(0)
    kx, kp = jax.random.split(key)

    # Small shapes consistent with the module: flatten a NCHW tensor.
    batch, channels, spatial = 2, 4, 16
    input_dim = channels * spatial * spatial        # 1024
    output_dim = 64

    x = jax.random.normal(kx, (batch, channels, spatial, spatial), jnp.float32)
    params = init_params(kp, input_dim, output_dim)

    out = neural_network_max_util_forward(x, params)
    out = jax.block_until_ready(out)

    # Pure-JAX f32 reference (kernel uses bf16 operands / bf16 store -> loose tol).
    def ref_forward(x, params):
        h = x.reshape(x.shape[0], -1)
        for i, (w, bvec) in enumerate(params):
            h = h @ w + bvec
            if i < len(params) - 1:
                h = jnp.maximum(h, 0.0)
        return jax.nn.sigmoid(h)

    ref = ref_forward(x, params)
    assert out.shape == (batch, output_dim)
    assert out.dtype == jnp.float32
    assert bool(jnp.all(jnp.isfinite(out)))
    assert bool(jnp.all((out >= -1e-2) & (out <= 1.0 + 1e-2)))
    assert float(jnp.max(jnp.abs(out - ref))) < 5e-2

    print("KERNEL_OK")
</pallas_src>

<mosaic_0001>
module attributes {stable_mosaic.version = 11 : i64} {
  func.func @_mlp_kernel(%arg0: i32, %arg1: memref<2x1024xf32, #tpu.memory_space<vmem>>, %arg2: memref<1024x128xbf16, #tpu.memory_space<vmem>>, %arg3: memref<1x128xf32, #tpu.memory_space<vmem>>, %arg4: memref<128x128xbf16, #tpu.memory_space<vmem>>, %arg5: memref<1x128xf32, #tpu.memory_space<vmem>>, %arg6: memref<128x128xbf16, #tpu.memory_space<vmem>>, %arg7: memref<1x128xf32, #tpu.memory_space<vmem>>, %arg8: memref<128x128xbf16, #tpu.memory_space<vmem>>, %arg9: memref<1x128xf32, #tpu.memory_space<vmem>>, %arg10: memref<128x128xbf16, #tpu.memory_space<vmem>>, %arg11: memref<1x128xf32, #tpu.memory_space<vmem>>, %arg12: memref<2x128xbf16, #tpu.memory_space<vmem>>) attributes {dimension_semantics = [#tpu.dimension_semantics<parallel>], iteration_bounds = array<i64: 1>, scalar_prefetch = 0 : i64, scratch_operands = 0 : i64, tpu.core_type = #tpu.core_type<tc>, window_params = [{transform_indices = @transform_0, window_bounds = array<i64: 2, 1024>}, {pipeline_mode = #tpu.pipeline_mode<synchronous>, transform_indices = @transform_1, window_bounds = array<i64: 1024, 128>}, {pipeline_mode = #tpu.pipeline_mode<synchronous>, transform_indices = @transform_2, window_bounds = array<i64: 1, 128>}, {pipeline_mode = #tpu.pipeline_mode<synchronous>, transform_indices = @transform_3, window_bounds = array<i64: 128, 128>}, {pipeline_mode = #tpu.pipeline_mode<synchronous>, transform_indices = @transform_4, window_bounds = array<i64: 1, 128>}, {pipeline_mode = #tpu.pipeline_mode<synchronous>, transform_indices = @transform_5, window_bounds = array<i64: 128, 128>}, {pipeline_mode = #tpu.pipeline_mode<synchronous>, transform_indices = @transform_6, window_bounds = array<i64: 1, 128>}, {pipeline_mode = #tpu.pipeline_mode<synchronous>, transform_indices = @transform_7, window_bounds = array<i64: 128, 128>}, {pipeline_mode = #tpu.pipeline_mode<synchronous>, transform_indices = @transform_8, window_bounds = array<i64: 1, 128>}, {pipeline_mode = #tpu.pipeline_mode<synchronous>, transform_indices = @transform_9, window_bounds = array<i64: 128, 128>}, {pipeline_mode = #tpu.pipeline_mode<synchronous>, transform_indices = @transform_10, window_bounds = array<i64: 1, 128>}, {transform_indices = @transform_11, window_bounds = array<i64: 2, 128>}]} {
    %c0 = arith.constant 0 : index
    %c0_0 = arith.constant 0 : index
    %0 = vector.load %arg1[%c0, %c0_0] : memref<2x1024xf32, #tpu.memory_space<vmem>>, vector<2x1024xf32>
    %1 = arith.truncf %0 : vector<2x1024xf32> to vector<2x1024xbf16>
    %c0_1 = arith.constant 0 : index
    %c0_2 = arith.constant 0 : index
    %2 = vector.load %arg2[%c0_1, %c0_2] : memref<1024x128xbf16, #tpu.memory_space<vmem>>, vector<1024x128xbf16>
    %cst = arith.constant dense<0.000000e+00> : vector<2x128xf32>
    %3 = tpu.matmul %1, %2, %cst {dimension_numbers = #tpu.dot_dimension_numbers<[1], [0], [0], [1], [0, 0, 1, 1], [], []>} : vector<2x1024xbf16>, vector<1024x128xbf16>, vector<2x128xf32> -> vector<2x128xf32>
    %c0_3 = arith.constant 0 : index
    %c0_4 = arith.constant 0 : index
    %4 = vector.load %arg3[%c0_3, %c0_4] : memref<1x128xf32, #tpu.memory_space<vmem>>, vector<1x128xf32>
    %5 = vector.broadcast %4 : vector<1x128xf32> to vector<2x128xf32>
    %6 = arith.addf %3, %5 : vector<2x128xf32>
    %cst_5 = arith.constant 0.000000e+00 : f32
    %7 = vector.broadcast %cst_5 : f32 to vector<2x128xf32>
    %8 = arith.maximumf %6, %7 : vector<2x128xf32>
    %9 = arith.truncf %8 : vector<2x128xf32> to vector<2x128xbf16>
    %c0_6 = arith.constant 0 : index
    %c0_7 = arith.constant 0 : index
    %10 = vector.load %arg4[%c0_6, %c0_7] : memref<128x128xbf16, #tpu.memory_space<vmem>>, vector<128x128xbf16>
    %cst_8 = arith.constant dense<0.000000e+00> : vector<2x128xf32>
    %11 = tpu.matmul %9, %10, %cst_8 {dimension_numbers = #tpu.dot_dimension_numbers<[1], [0], [0], [1], [0, 0, 1, 1], [], []>} : vector<2x128xbf16>, vector<128x128xbf16>, vector<2x128xf32> -> vector<2x128xf32>
    %c0_9 = arith.constant 0 : index
    %c0_10 = arith.constant 0 : index
    %12 = vector.load %arg5[%c0_9, %c0_10] : memref<1x128xf32, #tpu.memory_space<vmem>>, vector<1x128xf32>
    %13 = vector.broadcast %12 : vector<1x128xf32> to vector<2x128xf32>
    %14 = arith.addf %11, %13 : vector<2x128xf32>
    %cst_11 = arith.constant 0.000000e+00 : f32
    %15 = vector.broadcast %cst_11 : f32 to vector<2x128xf32>
    %16 = arith.maximumf %14, %15 : vector<2x128xf32>
    %17 = arith.truncf %16 : vector<2x128xf32> to vector<2x128xbf16>
    %c0_12 = arith.constant 0 : index
    %c0_13 = arith.constant 0 : index
    %18 = vector.load %arg6[%c0_12, %c0_13] : memref<128x128xbf16, #tpu.memory_space<vmem>>, vector<128x128xbf16>
    %cst_14 = arith.constant dense<0.000000e+00> : vector<2x128xf32>
    %19 = tpu.matmul %17, %18, %cst_14 {dimension_numbers = #tpu.dot_dimension_numbers<[1], [0], [0], [1], [0, 0, 1, 1], [], []>} : vector<2x128xbf16>, vector<128x128xbf16>, vector<2x128xf32> -> vector<2x128xf32>
    %c0_15 = arith.constant 0 : index
    %c0_16 = arith.constant 0 : index
    %20 = vector.load %arg7[%c0_15, %c0_16] : memref<1x128xf32, #tpu.memory_space<vmem>>, vector<1x128xf32>
    %21 = vector.broadcast %20 : vector<1x128xf32> to vector<2x128xf32>
    %22 = arith.addf %19, %21 : vector<2x128xf32>
    %cst_17 = arith.constant 0.000000e+00 : f32
    %23 = vector.broadcast %cst_17 : f32 to vector<2x128xf32>
    %24 = arith.maximumf %22, %23 : vector<2x128xf32>
    %25 = arith.truncf %24 : vector<2x128xf32> to vector<2x128xbf16>
    %c0_18 = arith.constant 0 : index
    %c0_19 = arith.constant 0 : index
    %26 = vector.load %arg8[%c0_18, %c0_19] : memref<128x128xbf16, #tpu.memory_space<vmem>>, vector<128x128xbf16>
    %cst_20 = arith.constant dense<0.000000e+00> : vector<2x128xf32>
    %27 = tpu.matmul %25, %26, %cst_20 {dimension_numbers = #tpu.dot_dimension_numbers<[1], [0], [0], [1], [0, 0, 1, 1], [], []>} : vector<2x128xbf16>, vector<128x128xbf16>, vector<2x128xf32> -> vector<2x128xf32>
    %c0_21 = arith.constant 0 : index
    %c0_22 = arith.constant 0 : index
    %28 = vector.load %arg9[%c0_21, %c0_22] : memref<1x128xf32, #tpu.memory_space<vmem>>, vector<1x128xf32>
    %29 = vector.broadcast %28 : vector<1x128xf32> to vector<2x128xf32>
    %30 = arith.addf %27, %29 : vector<2x128xf32>
    %cst_23 = arith.constant 0.000000e+00 : f32
    %31 = vector.broadcast %cst_23 : f32 to vector<2x128xf32>
    %32 = arith.maximumf %30, %31 : vector<2x128xf32>
    %33 = arith.truncf %32 : vector<2x128xf32> to vector<2x128xbf16>
    %c0_24 = arith.constant 0 : index
    %c0_25 = arith.constant 0 : index
    %34 = vector.load %arg10[%c0_24, %c0_25] : memref<128x128xbf16, #tpu.memory_space<vmem>>, vector<128x128xbf16>
    %cst_26 = arith.constant dense<0.000000e+00> : vector<2x128xf32>
    %35 = tpu.matmul %33, %34, %cst_26 {dimension_numbers = #tpu.dot_dimension_numbers<[1], [0], [0], [1], [0, 0, 1, 1], [], []>} : vector<2x128xbf16>, vector<128x128xbf16>, vector<2x128xf32> -> vector<2x128xf32>
    %c0_27 = arith.constant 0 : index
    %c0_28 = arith.constant 0 : index
    %36 = vector.load %arg11[%c0_27, %c0_28] : memref<1x128xf32, #tpu.memory_space<vmem>>, vector<1x128xf32>
    %37 = vector.broadcast %36 : vector<1x128xf32> to vector<2x128xf32>
    %38 = arith.addf %35, %37 : vector<2x128xf32>
    %cst_29 = arith.constant 0.000000e+00 : f32
    %39 = vector.broadcast %cst_29 : f32 to vector<2x128xf32>
    %40 = arith.subf %39, %38 : vector<2x128xf32>
    %41 = math.exp %40 : vector<2x128xf32>
    %cst_30 = arith.constant 1.000000e+00 : f32
    %42 = vector.broadcast %cst_30 : f32 to vector<2x128xf32>
    %43 = arith.addf %42, %41 : vector<2x128xf32>
    %44 = tpu.reciprocal %43 {approx = true} : vector<2x128xf32> -> vector<2x128xf32>
    %45 = arith.truncf %44 : vector<2x128xf32> to vector<2x128xbf16>
    %c0_31 = arith.constant 0 : index
    %c0_32 = arith.constant 0 : index
    %46 = vector.load %arg12[%c0_31, %c0_32] : memref<2x128xbf16, #tpu.memory_space<vmem>>, vector<2x128xbf16>
    tpu.vector_store %arg12[%c0_31, %c0_32], %45 {strides = array<i32>} : memref<2x128xbf16, #tpu.memory_space<vmem>>, vector<2x128xbf16>,
    return
  }
  func.func @transform_0(%arg0: i32) -> (i32, i32) {
    %c0_i32 = arith.constant 0 : i32
    %c0_i32_0 = arith.constant 0 : i32
    return %arg0, %c0_i32 : i32, i32
  }
  func.func @transform_1(%arg0: i32) -> (i32, i32) {
    %c0_i32 = arith.constant 0 : i32
    %c0_i32_0 = arith.constant 0 : i32
    %c0_i32_1 = arith.constant 0 : i32
    return %c0_i32, %c0_i32_0 : i32, i32
  }
  func.func @transform_2(%arg0: i32) -> (i32, i32) {
    %c0_i32 = arith.constant 0 : i32
    %c0_i32_0 = arith.constant 0 : i32
    %c0_i32_1 = arith.constant 0 : i32
    return %c0_i32, %c0_i32_0 : i32, i32
  }
  func.func @transform_3(%arg0: i32) -> (i32, i32) {
    %c0_i32 = arith.constant 0 : i32
    %c0_i32_0 = arith.constant 0 : i32
    %c0_i32_1 = arith.constant 0 : i32
    return %c0_i32, %c0_i32_0 : i32, i32
  }
  func.func @transform_4(%arg0: i32) -> (i32, i32) {
    %c0_i32 = arith.constant 0 : i32
    %c0_i32_0 = arith.constant 0 : i32
    %c0_i32_1 = arith.constant 0 : i32
    return %c0_i32, %c0_i32_0 : i32, i32
  }
  func.func @transform_5(%arg0: i32) -> (i32, i32) {
    %c0_i32 = arith.constant 0 : i32
    %c0_i32_0 = arith.constant 0 : i32
    %c0_i32_1 = arith.constant 0 : i32
    return %c0_i32, %c0_i32_0 : i32, i32
  }
  func.func @transform_6(%arg0: i32) -> (i32, i32) {
    %c0_i32 = arith.constant 0 : i32
    %c0_i32_0 = arith.constant 0 : i32
    %c0_i32_1 = arith.constant 0 : i32
    return %c0_i32, %c0_i32_0 : i32, i32
  }
  func.func @transform_7(%arg0: i32) -> (i32, i32) {
    %c0_i32 = arith.constant 0 : i32
    %c0_i32_0 = arith.constant 0 : i32
    %c0_i32_1 = arith.constant 0 : i32
    return %c0_i32, %c0_i32_0 : i32, i32
  }
  func.func @transform_8(%arg0: i32) -> (i32, i32) {
    %c0_i32 = arith.constant 0 : i32
    %c0_i32_0 = arith.constant 0 : i32
    %c0_i32_1 = arith.constant 0 : i32
    return %c0_i32, %c0_i32_0 : i32, i32
  }
  func.func @transform_9(%arg0: i32) -> (i32, i32) {
    %c0_i32 = arith.constant 0 : i32
    %c0_i32_0 = arith.constant 0 : i32
    %c0_i32_1 = arith.constant 0 : i32
    return %c0_i32, %c0_i32_0 : i32, i32
  }
  func.func @transform_10(%arg0: i32) -> (i32, i32) {
    %c0_i32 = arith.constant 0 : i32
    %c0_i32_0 = arith.constant 0 : i32
    %c0_i32_1 = arith.constant 0 : i32
    return %c0_i32, %c0_i32_0 : i32, i32
  }
  func.func @transform_11(%arg0: i32) -> (i32, i32) {
    %c0_i32 = arith.constant 0 : i32
    %c0_i32_0 = arith.constant 0 : i32
    return %arg0, %c0_i32 : i32, i32
  }
}

</mosaic_0001>

<llo_original>
// kernel: neural_network_max_util_forward.1
$region0: #{neural_network_max_util_forward.1}
  #allocation0 [shape = 'u32[]', space=smem, size = 0x4, offset = 0x4, fixed_abs, tag = 'smem constant byte address 0x4 - core index']
  #allocation1 [shape = 'u32[144,128]{1,0:T(1,128)}', space=vmem, size = 0x12000, scoped, tag = 'internal scratch']
  %s0 = inlined_call_operand.vmem [shape: f32[2,1024], index: 0, kind: input, shape index: {}]
  %s1 = inlined_call_operand.vmem [shape: bf16[1024,128], index: 1, kind: input, shape index: {}]
  %s2 = inlined_call_operand.vmem [shape: f32[1,128], index: 2, kind: input, shape index: {}]
  %s3 = inlined_call_operand.vmem [shape: bf16[128,128], index: 3, kind: input, shape index: {}]
  %s4 = inlined_call_operand.vmem [shape: f32[1,128], index: 4, kind: input, shape index: {}]
  %s5 = inlined_call_operand.vmem [shape: bf16[128,128], index: 5, kind: input, shape index: {}]
  %s6 = inlined_call_operand.vmem [shape: f32[1,128], index: 6, kind: input, shape index: {}]
  %s7 = inlined_call_operand.vmem [shape: bf16[128,128], index: 7, kind: input, shape index: {}]
  %s8 = inlined_call_operand.vmem [shape: f32[1,128], index: 8, kind: input, shape index: {}]
  %s9 = inlined_call_operand.vmem [shape: bf16[128,128], index: 9, kind: input, shape index: {}]
  %s10 = inlined_call_operand.vmem [shape: f32[1,128], index: 10, kind: input, shape index: {}]
  %s11 = inlined_call_operand.vmem [shape: bf16[2,128], index: 11, kind: output, shape index: {}]
  %s12 = sld [smem:[#allocation0]]
  $region54: #{neural_network_max_util_forward.1} parent=0
    _
  %s14 = ssub.s32 1, %s12
  %s15 = scalar_select 0, %s14, %s12
  // Predicated region
  $region2: #{neural_network_max_util_forward.1} parent=0 // pred_check
    _
  $region3: #{neural_network_max_util_forward.1} parent=0 // pred_check_branch
    %17 = sbr.rel (0) target = $region5
  $region4: #{neural_network_max_util_forward.1} parent=0 // pred_region
    _
  $region5: #{neural_network_max_util_forward.1} parent=0 // pred_fallthru
    _
  // Predicated region
  $region6: #{neural_network_max_util_forward.1} parent=0 // pred_check
    _
  $region7: #{neural_network_max_util_forward.1} parent=0 // pred_check_branch
    %19 = sbr.rel (0) target = $region9
  $region8: #{neural_network_max_util_forward.1} parent=0 // pred_region
    _
  $region9: #{neural_network_max_util_forward.1} parent=0 // pred_fallthru
    _
  // Predicated region
  $region10: #{neural_network_max_util_forward.1} parent=0 // pred_check
    _
  $region11: #{neural_network_max_util_forward.1} parent=0 // pred_check_branch
    %21 = sbr.rel (0) target = $region13
  $region12: #{neural_network_max_util_forward.1} parent=0 // pred_region
    _
  $region13: #{neural_network_max_util_forward.1} parent=0 // pred_fallthru
    _
  // Predicated region
  $region14: #{neural_network_max_util_forward.1} parent=0 // pred_check
    _
  $region15: #{neural_network_max_util_forward.1} parent=0 // pred_check_branch
    %23 = sbr.rel (0) target = $region17
  $region16: #{neural_network_max_util_forward.1} parent=0 // pred_region
    _
  $region17: #{neural_network_max_util_forward.1} parent=0 // pred_fallthru
    _
  // Predicated region
  $region18: #{neural_network_max_util_forward.1} parent=0 // pred_check
    _
  $region19: #{neural_network_max_util_forward.1} parent=0 // pred_check_branch
    %25 = sbr.rel (0) target = $region21
  $region20: #{neural_network_max_util_forward.1} parent=0 // pred_region
    _
  $region21: #{neural_network_max_util_forward.1} parent=0 // pred_fallthru
    _
  // Predicated region
  $region22: #{neural_network_max_util_forward.1} parent=0 // pred_check
    _
  $region23: #{neural_network_max_util_forward.1} parent=0 // pred_check_branch
    %27 = sbr.rel (0) target = $region25
  $region24: #{neural_network_max_util_forward.1} parent=0 // pred_region
    _
  $region25: #{neural_network_max_util_forward.1} parent=0 // pred_fallthru
    _
  // Predicated region
  $region26: #{neural_network_max_util_forward.1} parent=0 // pred_check
    _
  $region27: #{neural_network_max_util_forward.1} parent=0 // pred_check_branch
    %29 = sbr.rel (0) target = $region29
  $region28: #{neural_network_max_util_forward.1} parent=0 // pred_region
    _
  $region29: #{neural_network_max_util_forward.1} parent=0 // pred_fallthru
    _
  // Predicated region
  $region30: #{neural_network_max_util_forward.1} parent=0 // pred_check
    _
  $region31: #{neural_network_max_util_forward.1} parent=0 // pred_check_branch
    %31 = sbr.rel (0) target = $region33
  $region32: #{neural_network_max_util_forward.1} parent=0 // pred_region
    _
  $region33: #{neural_network_max_util_forward.1} parent=0 // pred_fallthru
    _
  // Predicated region
  $region34: #{neural_network_max_util_forward.1} parent=0 // pred_check
    _
  $region35: #{neural_network_max_util_forward.1} parent=0 // pred_check_branch
    %33 = sbr.rel (0) target = $region37
  $region36: #{neural_network_max_util_forward.1} parent=0 // pred_region
    _
  $region37: #{neural_network_max_util_forward.1} parent=0 // pred_fallthru
    _
  // Predicated region
  $region38: #{neural_network_max_util_forward.1} parent=0 // pred_check
    _
  $region39: #{neural_network_max_util_forward.1} parent=0 // pred_check_branch
    %35 = sbr.rel (0) target = $region41
  $region40: #{neural_network_max_util_forward.1} parent=0 // pred_region
    _
  $region41: #{neural_network_max_util_forward.1} parent=0 // pred_fallthru
    _
  // Predicated region
  $region42: #{neural_network_max_util_forward.1} parent=0 // pred_check
    _
  $region43: #{neural_network_max_util_forward.1} parent=0 // pred_check_branch
    %37 = sbr.rel (0) target = $region45
  $region44: #{neural_network_max_util_forward.1} parent=0 // pred_region
    _
  $region45: #{neural_network_max_util_forward.1} parent=0 // pred_fallthru
    _
  %v39 = vld [vmem:[%s0] sm:$0xff]
  %v40 = vld [vmem:[%s0 + $0x8] sm:$0xff]
  %v43 = vcombine.high %v39, %v39
  %v45 = vunpack.c.l.s4 1983009808
  %v46 = vunpack.c.0.s8 %v45
  %v47 = vlaneseq
  %v48 = vshrl.u32 %v47, 7
  %v49 = vsub.s32 %v46, %v48
  %v50 = vrot.slane %v39, %v49
  %v52 = vunpack.c.l.s4 1983009808
  %v53 = vunpack.c.0.s8 %v52
  %v54 = vlaneseq
  %v55 = vshrl.u32 %v54, 7
  %v56 = vsub.s32 %v53, %v55
  %v57 = vrot.slane %v43, %v56
  %v58 = vcombine.high %v50, %v50
  %v59 = vcombine.high %v57, %v57
  %v60 = vcombine.high %v40, %v40
  %v62 = vunpack.c.l.s4 1983009808
  %v63 = vunpack.c.0.s8 %v62
  %v64 = vlaneseq
  %v65 = vshrl.u32 %v64, 7
  %v66 = vsub.s32 %v63, %v65
  %v67 = vrot.slane %v40, %v66
  %v69 = vunpack.c.l.s4 1983009808
  %v70 = vunpack.c.0.s8 %v69
  %v71 = vlaneseq
  %v72 = vshrl.u32 %v71, 7
  %v73 = vsub.s32 %v70, %v72
  %v74 = vrot.slane %v60, %v73
  %v75 = vcombine.high %v67, %v67
  %v76 = vcombine.high %v74, %v74
  %v85 = vpack.c.bf16 %v50, %v50
  %v86 = vpack.c.bf16 %v58, %v58
  %v87 = vpack.c.bf16 %v57, %v57
  %v88 = vpack.c.bf16 %v59, %v59
  %v89 = vpack.c.bf16 %v67, %v67
  %v90 = vpack.c.bf16 %v75, %v75
  %v91 = vpack.c.bf16 %v74, %v74
  %v92 = vpack.c.bf16 %v76, %v76
  %v93 = vld [vmem:[%s1] sm:$0xf]
  %v94 = vld [vmem:[%s1 + $0x4] sm:$0xf]
  %v95 = vld [vmem:[%s1 + $0x8] sm:$0xf]
  %v96 = vld [vmem:[%s1 + $0xc] sm:$0xf]
  %v97 = vld [vmem:[%s1 + $0x10] sm:$0xf]
  %v98 = vld [vmem:[%s1 + $0x14] sm:$0xf]
  %v99 = vld [vmem:[%s1 + $0x18] sm:$0xf]
  %v100 = vld [vmem:[%s1 + $0x1c] sm:$0xf]
  %v101 = vld [vmem:[%s1 + $0x20] sm:$0xf]
  %v102 = vld [vmem:[%s1 + $0x24] sm:$0xf]
  %v103 = vld [vmem:[%s1 + $0x28] sm:$0xf]
  %v104 = vld [vmem:[%s1 + $0x2c] sm:$0xf]
  %v105 = vld [vmem:[%s1 + $0x30] sm:$0xf]
  %v106 = vld [vmem:[%s1 + $0x34] sm:$0xf]
  %v107 = vld [vmem:[%s1 + $0x38] sm:$0xf]
  %v108 = vld [vmem:[%s1 + $0x3c] sm:$0xf]
  %v109 = vld [vmem:[%s1 + $0x40] sm:$0xf]
  %v110 = vld [vmem:[%s1 + $0x44] sm:$0xf]
  %v111 = vld [vmem:[%s1 + $0x48] sm:$0xf]
  %v112 = vld [vmem:[%s1 + $0x4c] sm:$0xf]
  %v113 = vld [vmem:[%s1 + $0x50] sm:$0xf]
  %v114 = vld [vmem:[%s1 + $0x54] sm:$0xf]
  %v115 = vld [vmem:[%s1 + $0x58] sm:$0xf]
  %v116 = vld [vmem:[%s1 + $0x5c] sm:$0xf]
  %v117 = vld [vmem:[%s1 + $0x60] sm:$0xf]
  %v118 = vld [vmem:[%s1 + $0x64] sm:$0xf]
  %v119 = vld [vmem:[%s1 + $0x68] sm:$0xf]
  %v120 = vld [vmem:[%s1 + $0x6c] sm:$0xf]
  %v121 = vld [vmem:[%s1 + $0x70] sm:$0xf]
  %v122 = vld [vmem:[%s1 + $0x74] sm:$0xf]
  %v123 = vld [vmem:[%s1 + $0x78] sm:$0xf]
  %v124 = vld [vmem:[%s1 + $0x7c] sm:$0xf]
  %v125 = vld [vmem:[%s1 + $0x80] sm:$0xf]
  %v126 = vld [vmem:[%s1 + $0x84] sm:$0xf]
  %v127 = vld [vmem:[%s1 + $0x88] sm:$0xf]
  %v128 = vld [vmem:[%s1 + $0x8c] sm:$0xf]
  %v129 = vld [vmem:[%s1 + $0x90] sm:$0xf]
  %v130 = vld [vmem:[%s1 + $0x94] sm:$0xf]
  %v131 = vld [vmem:[%s1 + $0x98] sm:$0xf]
  %v132 = vld [vmem:[%s1 + $0x9c] sm:$0xf]
  %v133 = vld [vmem:[%s1 + $0xa0] sm:$0xf]
  %v134 = vld [vmem:[%s1 + $0xa4] sm:$0xf]
  %v135 = vld [vmem:[%s1 + $0xa8] sm:$0xf]
  %v136 = vld [vmem:[%s1 + $0xac] sm:$0xf]
  %v137 = vld [vmem:[%s1 + $0xb0] sm:$0xf]
  %v138 = vld [vmem:[%s1 + $0xb4] sm:$0xf]
  %v139 = vld [vmem:[%s1 + $0xb8] sm:$0xf]
  %v140 = vld [vmem:[%s1 + $0xbc] sm:$0xf]
  %v141 = vld [vmem:[%s1 + $0xc0] sm:$0xf]
  %v142 = vld [vmem:[%s1 + $0xc4] sm:$0xf]
  %v143 = vld [vmem:[%s1 + $0xc8] sm:$0xf]
  %v144 = vld [vmem:[%s1 + $0xcc] sm:$0xf]
  %v145 = vld [vmem:[%s1 + $0xd0] sm:$0xf]
  %v146 = vld [vmem:[%s1 + $0xd4] sm:$0xf]
  %v147 = vld [vmem:[%s1 + $0xd8] sm:$0xf]
  %v148 = vld [vmem:[%s1 + $0xdc] sm:$0xf]
  %v149 = vld [vmem:[%s1 + $0xe0] sm:$0xf]
  %v150 = vld [vmem:[%s1 + $0xe4] sm:$0xf]
  %v151 = vld [vmem:[%s1 + $0xe8] sm:$0xf]
  %v152 = vld [vmem:[%s1 + $0xec] sm:$0xf]
  %v153 = vld [vmem:[%s1 + $0xf0] sm:$0xf]
  %v154 = vld [vmem:[%s1 + $0xf4] sm:$0xf]
  %v155 = vld [vmem:[%s1 + $0xf8] sm:$0xf]
  %v156 = vld [vmem:[%s1 + $0xfc] sm:$0xf]
  %v157 = vld [vmem:[%s1 + $0x100] sm:$0xf]
  %v158 = vld [vmem:[%s1 + $0x104] sm:$0xf]
  %v159 = vld [vmem:[%s1 + $0x108] sm:$0xf]
  %v160 = vld [vmem:[%s1 + $0x10c] sm:$0xf]
  %v161 = vld [vmem:[%s1 + $0x110] sm:$0xf]
  %v162 = vld [vmem:[%s1 + $0x114] sm:$0xf]
  %v163 = vld [vmem:[%s1 + $0x118] sm:$0xf]
  %v164 = vld [vmem:[%s1 + $0x11c] sm:$0xf]
  %v165 = vld [vmem:[%s1 + $0x120] sm:$0xf]
  %v166 = vld [vmem:[%s1 + $0x124] sm:$0xf]
  %v167 = vld [vmem:[%s1 + $0x128] sm:$0xf]
  %v168 = vld [vmem:[%s1 + $0x12c] sm:$0xf]
  %v169 = vld [vmem:[%s1 + $0x130] sm:$0xf]
  %v170 = vld [vmem:[%s1 + $0x134] sm:$0xf]
  %v171 = vld [vmem:[%s1 + $0x138] sm:$0xf]
  %v172 = vld [vmem:[%s1 + $0x13c] sm:$0xf]
  %v173 = vld [vmem:[%s1 + $0x140] sm:$0xf]
  %v174 = vld [vmem:[%s1 + $0x144] sm:$0xf]
  %v175 = vld [vmem:[%s1 + $0x148] sm:$0xf]
  %v176 = vld [vmem:[%s1 + $0x14c] sm:$0xf]
  %v177 = vld [vmem:[%s1 + $0x150] sm:$0xf]
  %v178 = vld [vmem:[%s1 + $0x154] sm:$0xf]
  %v179 = vld [vmem:[%s1 + $0x158] sm:$0xf]
  %v180 = vld [vmem:[%s1 + $0x15c] sm:$0xf]
  %v181 = vld [vmem:[%s1 + $0x160] sm:$0xf]
  %v182 = vld [vmem:[%s1 + $0x164] sm:$0xf]
  %v183 = vld [vmem:[%s1 + $0x168] sm:$0xf]
  %v184 = vld [vmem:[%s1 + $0x16c] sm:$0xf]
  %v185 = vld [vmem:[%s1 + $0x170] sm:$0xf]
  %v186 = vld [vmem:[%s1 + $0x174] sm:$0xf]
  %v187 = vld [vmem:[%s1 + $0x178] sm:$0xf]
  %v188 = vld [vmem:[%s1 + $0x17c] sm:$0xf]
  %v189 = vld [vmem:[%s1 + $0x180] sm:$0xf]
  %v190 = vld [vmem:[%s1 + $0x184] sm:$0xf]
  %v191 = vld [vmem:[%s1 + $0x188] sm:$0xf]
  %v192 = vld [vmem:[%s1 + $0x18c] sm:$0xf]
  %v193 = vld [vmem:[%s1 + $0x190] sm:$0xf]
  %v194 = vld [vmem:[%s1 + $0x194] sm:$0xf]
  %v195 = vld [vmem:[%s1 + $0x198] sm:$0xf]
  %v196 = vld [vmem:[%s1 + $0x19c] sm:$0xf]
  %v197 = vld [vmem:[%s1 + $0x1a0] sm:$0xf]
  %v198 = vld [vmem:[%s1 + $0x1a4] sm:$0xf]
  %v199 = vld [vmem:[%s1 + $0x1a8] sm:$0xf]
  %v200 = vld [vmem:[%s1 + $0x1ac] sm:$0xf]
  %v201 = vld [vmem:[%s1 + $0x1b0] sm:$0xf]
  %v202 = vld [vmem:[%s1 + $0x1b4] sm:$0xf]
  %v203 = vld [vmem:[%s1 + $0x1b8] sm:$0xf]
  %v204 = vld [vmem:[%s1 + $0x1bc] sm:$0xf]
  %v205 = vld [vmem:[%s1 + $0x1c0] sm:$0xf]
  %v206 = vld [vmem:[%s1 + $0x1c4] sm:$0xf]
  %v207 = vld [vmem:[%s1 + $0x1c8] sm:$0xf]
  %v208 = vld [vmem:[%s1 + $0x1cc] sm:$0xf]
  %v209 = vld [vmem:[%s1 + $0x1d0] sm:$0xf]
  %v210 = vld [vmem:[%s1 + $0x1d4] sm:$0xf]
  %v211 = vld [vmem:[%s1 + $0x1d8] sm:$0xf]
  %v212 = vld [vmem:[%s1 + $0x1dc] sm:$0xf]
  %v213 = vld [vmem:[%s1 + $0x1e0] sm:$0xf]
  %v214 = vld [vmem:[%s1 + $0x1e4] sm:$0xf]
  %v215 = vld [vmem:[%s1 + $0x1e8] sm:$0xf]
  %v216 = vld [vmem:[%s1 + $0x1ec] sm:$0xf]
  %v217 = vld [vmem:[%s1 + $0x1f0] sm:$0xf]
  %v218 = vld [vmem:[%s1 + $0x1f4] sm:$0xf]
  %v219 = vld [vmem:[%s1 + $0x1f8] sm:$0xf]
  %v220 = vld [vmem:[%s1 + $0x1fc] sm:$0xf]
  %v221 = vld [vmem:[%s2] sm:$0x1]
  %v223 = vlaneseq
  %v224 = vshrl.u32 %v223, 7
  %v225 = vsub.s32 0, %v224
  %v226 = vrot.slane %v221, %v225
  %v356 = vunpack.c.l.b16 %v93
  %v357 = vunpack.c.l.b16 %v94
  %v358 = vunpack.c.l.b16 %v95
  %v359 = vunpack.c.l.b16 %v96
  %v360 = vunpack.c.l.b16 %v97
  %v361 = vunpack.c.l.b16 %v98
  %v362 = vunpack.c.l.b16 %v99
  %v363 = vunpack.c.l.b16 %v100
  %v364 = vunpack.c.l.b16 %v101
  %v365 = vunpack.c.l.b16 %v102
  %v366 = vunpack.c.l.b16 %v103
  %v367 = vunpack.c.l.b16 %v104
  %v368 = vunpack.c.l.b16 %v105
  %v369 = vunpack.c.l.b16 %v106
  %v370 = vunpack.c.l.b16 %v107
  %v371 = vunpack.c.l.b16 %v108
  %v372 = vunpack.c.l.b16 %v109
  %v373 = vunpack.c.l.b16 %v110
  %v374 = vunpack.c.l.b16 %v111
  %v375 = vunpack.c.l.b16 %v112
  %v376 = vunpack.c.l.b16 %v113
  %v377 = vunpack.c.l.b16 %v114
  %v378 = vunpack.c.l.b16 %v115
  %v379 = vunpack.c.l.b16 %v116
  %v380 = vunpack.c.l.b16 %v117
  %v381 = vunpack.c.l.b16 %v118
  %v382 = vunpack.c.l.b16 %v119
  %v383 = vunpack.c.l.b16 %v120
  %v384 = vunpack.c.l.b16 %v121
  %v385 = vunpack.c.l.b16 %v122
  %v386 = vunpack.c.l.b16 %v123
  %v387 = vunpack.c.l.b16 %v124
  %v388 = vunpack.c.l.b16 %v125
  %v389 = vunpack.c.l.b16 %v126
  %v390 = vunpack.c.l.b16 %v127
  %v391 = vunpack.c.l.b16 %v128
  %v392 = vunpack.c.l.b16 %v129
  %v393 = vunpack.c.l.b16 %v130
  %v394 = vunpack.c.l.b16 %v131
  %v395 = vunpack.c.l.b16 %v132
  %v396 = vunpack.c.l.b16 %v133
  %v397 = vunpack.c.l.b16 %v134
  %v398 = vunpack.c.l.b16 %v135
  %v399 = vunpack.c.l.b16 %v136
  %v400 = vunpack.c.l.b16 %v137
  %v401 = vunpack.c.l.b16 %v138
  %v402 = vunpack.c.l.b16 %v139
  %v403 = vunpack.c.l.b16 %v140
  %v404 = vunpack.c.l.b16 %v141
  %v405 = vunpack.c.l.b16 %v142
  %v406 = vunpack.c.l.b16 %v143
  %v407 = vunpack.c.l.b16 %v144
  %v408 = vunpack.c.l.b16 %v145
  %v409 = vunpack.c.l.b16 %v146
  %v410 = vunpack.c.l.b16 %v147
  %v411 = vunpack.c.l.b16 %v148
  %v412 = vunpack.c.l.b16 %v149
  %v413 = vunpack.c.l.b16 %v150
  %v414 = vunpack.c.l.b16 %v151
  %v415 = vunpack.c.l.b16 %v152
  %v416 = vunpack.c.l.b16 %v153
  %v417 = vunpack.c.l.b16 %v154
  %v418 = vunpack.c.l.b16 %v155
  %v419 = vunpack.c.l.b16 %v156
  %v420 = vunpack.c.l.b16 %v157
  %v421 = vunpack.c.l.b16 %v158
  %v422 = vunpack.c.l.b16 %v159
  %v423 = vunpack.c.l.b16 %v160
  %v424 = vunpack.c.l.b16 %v161
  %v425 = vunpack.c.l.b16 %v162
  %v426 = vunpack.c.l.b16 %v163
  %v427 = vunpack.c.l.b16 %v164
  %v428 = vunpack.c.l.b16 %v165
  %v429 = vunpack.c.l.b16 %v166
  %v430 = vunpack.c.l.b16 %v167
  %v431 = vunpack.c.l.b16 %v168
  %v432 = vunpack.c.l.b16 %v169
  %v433 = vunpack.c.l.b16 %v170
  %v434 = vunpack.c.l.b16 %v171
  %v435 = vunpack.c.l.b16 %v172
  %v436 = vunpack.c.l.b16 %v173
  %v437 = vunpack.c.l.b16 %v174
  %v438 = vunpack.c.l.b16 %v175
  %v439 = vunpack.c.l.b16 %v176
  %v440 = vunpack.c.l.b16 %v177
  %v441 = vunpack.c.l.b16 %v178
  %v442 = vunpack.c.l.b16 %v179
  %v443 = vunpack.c.l.b16 %v180
  %v444 = vunpack.c.l.b16 %v181
  %v445 = vunpack.c.l.b16 %v182
  %v446 = vunpack.c.l.b16 %v183
  %v447 = vunpack.c.l.b16 %v184
  %v448 = vunpack.c.l.b16 %v185
  %v449 = vunpack.c.l.b16 %v186
  %v450 = vunpack.c.l.b16 %v187
  %v451 = vunpack.c.l.b16 %v188
  %v452 = vunpack.c.l.b16 %v189
  %v453 = vunpack.c.l.b16 %v190
  %v454 = vunpack.c.l.b16 %v191
  %v455 = vunpack.c.l.b16 %v192
  %v456 = vunpack.c.l.b16 %v193
  %v457 = vunpack.c.l.b16 %v194
  %v458 = vunpack.c.l.b16 %v195
  %v459 = vunpack.c.l.b16 %v196
  %v460 = vunpack.c.l.b16 %v197
  %v461 = vunpack.c.l.b16 %v198
  %v462 = vunpack.c.l.b16 %v199
  %v463 = vunpack.c.l.b16 %v200
  %v464 = vunpack.c.l.b16 %v201
  %v465 = vunpack.c.l.b16 %v202
  %v466 = vunpack.c.l.b16 %v203
  %v467 = vunpack.c.l.b16 %v204
  %v468 = vunpack.c.l.b16 %v205
  %v469 = vunpack.c.l.b16 %v206
  %v470 = vunpack.c.l.b16 %v207
  %v471 = vunpack.c.l.b16 %v208
  %v472 = vunpack.c.l.b16 %v209
  %v473 = vunpack.c.l.b16 %v210
  %v474 = vunpack.c.l.b16 %v211
  %v475 = vunpack.c.l.b16 %v212
  %v476 = vunpack.c.l.b16 %v213
  %v477 = vunpack.c.l.b16 %v214
  %v478 = vunpack.c.l.b16 %v215
  %v479 = vunpack.c.l.b16 %v216
  %v480 = vunpack.c.l.b16 %v217
  %v481 = vunpack.c.l.b16 %v218
  %v482 = vunpack.c.l.b16 %v219
  %v483 = vunpack.c.l.b16 %v220
  %v484 = vpack.c.b16 %v357, %v356
  %v485 = vpack.c.b16 %v359, %v358
  %v486 = vpack.c.b16 %v361, %v360
  %v487 = vpack.c.b16 %v363, %v362
  %v488 = vpack.c.b16 %v365, %v364
  %v489 = vpack.c.b16 %v367, %v366
  %v490 = vpack.c.b16 %v369, %v368
  %v491 = vpack.c.b16 %v371, %v370
  %v492 = vpack.c.b16 %v373, %v372
  %v493 = vpack.c.b16 %v375, %v374
  %v494 = vpack.c.b16 %v377, %v376
  %v495 = vpack.c.b16 %v379, %v378
  %v496 = vpack.c.b16 %v381, %v380
  %v497 = vpack.c.b16 %v383, %v382
  %v498 = vpack.c.b16 %v385, %v384
  %v499 = vpack.c.b16 %v387, %v386
  %v500 = vpack.c.b16 %v389, %v388
  %v501 = vpack.c.b16 %v391, %v390
  %v502 = vpack.c.b16 %v393, %v392
  %v503 = vpack.c.b16 %v395, %v394
  %v504 = vpack.c.b16 %v397, %v396
  %v505 = vpack.c.b16 %v399, %v398
  %v506 = vpack.c.b16 %v401, %v400
  %v507 = vpack.c.b16 %v403, %v402
  %v508 = vpack.c.b16 %v405, %v404
  %v509 = vpack.c.b16 %v407, %v406
  %v510 = vpack.c.b16 %v409, %v408
  %v511 = vpack.c.b16 %v411, %v410
  %v512 = vpack.c.b16 %v413, %v412
  %v513 = vpack.c.b16 %v415, %v414
  %v514 = vpack.c.b16 %v417, %v416
  %v515 = vpack.c.b16 %v419, %v418
  %v516 = vpack.c.b16 %v421, %v420
  %v517 = vpack.c.b16 %v423, %v422
  %v518 = vpack.c.b16 %v425, %v424
  %v519 = vpack.c.b16 %v427, %v426
  %v520 = vpack.c.b16 %v429, %v428
  %v521 = vpack.c.b16 %v431, %v430
  %v522 = vpack.c.b16 %v433, %v432
  %v523 = vpack.c.b16 %v435, %v434
  %v524 = vpack.c.b16 %v437, %v436
  %v525 = vpack.c.b16 %v439, %v438
  %v526 = vpack.c.b16 %v441, %v440
  %v527 = vpack.c.b16 %v443, %v442
  %v528 = vpack.c.b16 %v445, %v444
  %v529 = vpack.c.b16 %v447, %v446
  %v530 = vpack.c.b16 %v449, %v448
  %v531 = vpack.c.b16 %v451, %v450
  %v532 = vpack.c.b16 %v453, %v452
  %v533 = vpack.c.b16 %v455, %v454
  %v534 = vpack.c.b16 %v457, %v456
  %v535 = vpack.c.b16 %v459, %v458
  %v536 = vpack.c.b16 %v461, %v460
  %v537 = vpack.c.b16 %v463, %v462
  %v538 = vpack.c.b16 %v465, %v464
  %v539 = vpack.c.b16 %v467, %v466
  %v540 = vpack.c.b16 %v469, %v468
  %v541 = vpack.c.b16 %v471, %v470
  %v542 = vpack.c.b16 %v473, %v472
  %v543 = vpack.c.b16 %v475, %v474
  %v544 = vpack.c.b16 %v477, %v476
  %v545 = vpack.c.b16 %v479, %v478
  %v546 = vpack.c.b16 %v481, %v480
  %v547 = vpack.c.b16 %v483, %v482
  %612 = vmatprep.subr.bf16.mxu0 0
  %613 = vmatpush1.bf16.msra.mxu0 %v491
  %614 = vmatprep.subr.bf16.mxu0 0
  %615 = vmatpush1.bf16.msra.mxu0 %v490
  %616 = vmatprep.subr.bf16.mxu0 0
  %617 = vmatpush1.bf16.msra.mxu0 %v489
  %618 = vmatprep.subr.bf16.mxu0 0
  %619 = vmatpush1.bf16.msra.mxu0 %v488
  %620 = vmatprep.subr.bf16.mxu0 0
  %621 = vmatpush1.bf16.msra.mxu0 %v487
  %622 = vmatprep.subr.bf16.mxu0 0
  %623 = vmatpush1.bf16.msra.mxu0 %v486
  %624 = vmatprep.subr.bf16.mxu0 0
  %625 = vmatpush1.bf16.msra.mxu0 %v485
  %626 = vmatprep.subr.bf16.mxu0 0
  %627 = vmatpush1.bf16.msra.mxu0 %v484
  %628 = vmatprep.subr.bf16.mxu0 0
  %629 = vmatpush2.bf16.msra.mxu0 %v499
  %630 = vmatprep.subr.bf16.mxu0 0
  %631 = vmatpush2.bf16.msra.mxu0 %v498
  %632 = vmatprep.subr.bf16.mxu0 0
  %633 = vmatpush2.bf16.msra.mxu0 %v497
  %634 = vmatprep.subr.bf16.mxu0 0
  %635 = vmatpush2.bf16.msra.mxu0 %v496
  %636 = vmatprep.subr.bf16.mxu0 0
  %637 = vmatpush2.bf16.msra.mxu0 %v495
  %638 = vmatprep.subr.bf16.mxu0 0
  %639 = vmatpush2.bf16.msra.mxu0 %v494
  %640 = vmatprep.subr.bf16.mxu0 0
  %641 = vmatpush2.bf16.msra.mxu0 %v493
  %642 = vmatprep.subr.bf16.mxu0 0
  %643 = vmatpush2.bf16.msra.mxu0 %v492
  %644 = vmatprep.mubr.bf16.mxu0 %v86
  %645 = vmatmul.mubr.bf16.gmra.mxu0 %v85
  %v646 = vpop.f32.mrf.mxu0
  %v647 = vadd.f32 %v226, %v646
  %v648 = vpop.f32.mrf.mxu0
  %v649 = vpop.f32.mrf.mxu0
  %v650 = vpop.f32.mrf.mxu0
  %651 = vdwg.mxu0
  %652 = vmatprep.subr.bf16.mxu0 0
  %653 = vmatpush1.bf16.msra.mxu0 %v507
  %654 = vmatprep.subr.bf16.mxu0 0
  %655 = vmatpush1.bf16.msra.mxu0 %v506
  %656 = vmatprep.subr.bf16.mxu0 0
  %657 = vmatpush1.bf16.msra.mxu0 %v505
  %658 = vmatprep.subr.bf16.mxu0 0
  %659 = vmatpush1.bf16.msra.mxu0 %v504
  %660 = vmatprep.subr.bf16.mxu0 0
  %661 = vmatpush1.bf16.msra.mxu0 %v503
  %662 = vmatprep.subr.bf16.mxu0 0
  %663 = vmatpush1.bf16.msra.mxu0 %v502
  %664 = vmatprep.subr.bf16.mxu0 0
  %665 = vmatpush1.bf16.msra.mxu0 %v501
  %666 = vmatprep.subr.bf16.mxu0 0
  %667 = vmatpush1.bf16.msra.mxu0 %v500
  %668 = vmatprep.subr.bf16.mxu0 0
  %669 = vmatpush2.bf16.msra.mxu0 %v515
  %670 = vmatprep.subr.bf16.mxu0 0
  %671 = vmatpush2.bf16.msra.mxu0 %v514
  %672 = vmatprep.subr.bf16.mxu0 0
  %673 = vmatpush2.bf16.msra.mxu0 %v513
  %674 = vmatprep.subr.bf16.mxu0 0
  %675 = vmatpush2.bf16.msra.mxu0 %v512
  %676 = vmatprep.subr.bf16.mxu0 0
  %677 = vmatpush2.bf16.msra.mxu0 %v511
  %678 = vmatprep.subr.bf16.mxu0 0
  %679 = vmatpush2.bf16.msra.mxu0 %v510
  %680 = vmatprep.subr.bf16.mxu0 0
  %681 = vmatpush2.bf16.msra.mxu0 %v509
  %682 = vmatprep.subr.bf16.mxu0 0
  %683 = vmatpush2.bf16.msra.mxu0 %v508
  %684 = vmatprep.mubr.bf16.mxu0 %v88
  %685 = vmatmul.mubr.bf16.gmra.mxu0 %v87
  %v686 = vpop.f32.mrf.mxu0
  %v687 = vadd.f32 %v647, %v686
  %v688 = vpop.f32.mrf.mxu0
  %v689 = vpop.f32.mrf.mxu0
  %v690 = vpop.f32.mrf.mxu0
  %691 = vdwg.mxu0
  %692 = vmatprep.subr.bf16.mxu0 0
  %693 = vmatpush1.bf16.msra.mxu0 %v523
  %694 = vmatprep.subr.bf16.mxu0 0
  %695 = vmatpush1.bf16.msra.mxu0 %v522
  %696 = vmatprep.subr.bf16.mxu0 0
  %697 = vmatpush1.bf16.msra.mxu0 %v521
  %698 = vmatprep.subr.bf16.mxu0 0
  %699 = vmatpush1.bf16.msra.mxu0 %v520
  %700 = vmatprep.subr.bf16.mxu0 0
  %701 = vmatpush1.bf16.msra.mxu0 %v519
  %702 = vmatprep.subr.bf16.mxu0 0
  %703 = vmatpush1.bf16.msra.mxu0 %v518
  %704 = vmatprep.subr.bf16.mxu0 0
  %705 = vmatpush1.bf16.msra.mxu0 %v517
  %706 = vmatprep.subr.bf16.mxu0 0
  %707 = vmatpush1.bf16.msra.mxu0 %v516
  %708 = vmatprep.subr.bf16.mxu0 0
  %709 = vmatpush2.bf16.msra.mxu0 %v531
  %710 = vmatprep.subr.bf16.mxu0 0
  %711 = vmatpush2.bf16.msra.mxu0 %v530
  %712 = vmatprep.subr.bf16.mxu0 0
  %713 = vmatpush2.bf16.msra.mxu0 %v529
  %714 = vmatprep.subr.bf16.mxu0 0
  %715 = vmatpush2.bf16.msra.mxu0 %v528
  %716 = vmatprep.subr.bf16.mxu0 0
  %717 = vmatpush2.bf16.msra.mxu0 %v527
  %718 = vmatprep.subr.bf16.mxu0 0
  %719 = vmatpush2.bf16.msra.mxu0 %v526
  %720 = vmatprep.subr.bf16.mxu0 0
  %721 = vmatpush2.bf16.msra.mxu0 %v525
  %722 = vmatprep.subr.bf16.mxu0 0
  %723 = vmatpush2.bf16.msra.mxu0 %v524
  %724 = vmatprep.mubr.bf16.mxu0 %v90
  %725 = vmatmul.mubr.bf16.gmra.mxu0 %v89
  %v726 = vpop.f32.mrf.mxu0
  %v727 = vadd.f32 %v687, %v726
  %v728 = vpop.f32.mrf.mxu0
  %v729 = vpop.f32.mrf.mxu0
  %v730 = vpop.f32.mrf.mxu0
  %731 = vdwg.mxu0
  %732 = vmatprep.subr.bf16.mxu0 0
  %733 = vmatpush1.bf16.msra.mxu0 %v539
  %734 = vmatprep.subr.bf16.mxu0 0
  %735 = vmatpush1.bf16.msra.mxu0 %v538
  %736 = vmatprep.subr.bf16.mxu0 0
  %737 = vmatpush1.bf16.msra.mxu0 %v537
  %738 = vmatprep.subr.bf16.mxu0 0
  %739 = vmatpush1.bf16.msra.mxu0 %v536
  %740 = vmatprep.subr.bf16.mxu0 0
  %741 = vmatpush1.bf16.msra.mxu0 %v535
  %742 = vmatprep.subr.bf16.mxu0 0
  %743 = vmatpush1.bf16.msra.mxu0 %v534
  %744 = vmatprep.subr.bf16.mxu0 0
  %745 = vmatpush1.bf16.msra.mxu0 %v533
  %746 = vmatprep.subr.bf16.mxu0 0
  %747 = vmatpush1.bf16.msra.mxu0 %v532
  %748 = vmatprep.subr.bf16.mxu0 0
  %749 = vmatpush2.bf16.msra.mxu0 %v547
  %750 = vmatprep.subr.bf16.mxu0 0
  %751 = vmatpush2.bf16.msra.mxu0 %v546
  %752 = vmatprep.subr.bf16.mxu0 0
  %753 = vmatpush2.bf16.msra.mxu0 %v545
  %754 = vmatprep.subr.bf16.mxu0 0
  %755 = vmatpush2.bf16.msra.mxu0 %v544
  %756 = vmatprep.subr.bf16.mxu0 0
  %757 = vmatpush2.bf16.msra.mxu0 %v543
  %758 = vmatprep.subr.bf16.mxu0 0
  %759 = vmatpush2.bf16.msra.mxu0 %v542
  %760 = vmatprep.subr.bf16.mxu0 0
  %761 = vmatpush2.bf16.msra.mxu0 %v541
  %762 = vmatprep.subr.bf16.mxu0 0
  %763 = vmatpush2.bf16.msra.mxu0 %v540
  %764 = vmatprep.mubr.bf16.mxu0 %v92
  %765 = vmatmul.mubr.bf16.gmra.mxu0 %v91
  %v766 = vpop.f32.mrf.mxu0
  %v767 = vadd.f32 %v727, %v766
  %v768 = vpop.f32.mrf.mxu0
  %v769 = vpop.f32.mrf.mxu0
  %v770 = vpop.f32.mrf.mxu0
  %771 = vdwg.mxu0
  %v772 = vmax.f32 %v767, 0.0
  %v773 = vpack.c.bf16 %v772, %v772
  %v774 = vld [vmem:[%s3] sm:$0xf]
  %v775 = vld [vmem:[%s3 + $0x4] sm:$0xf]
  %v776 = vld [vmem:[%s3 + $0x8] sm:$0xf]
  %v777 = vld [vmem:[%s3 + $0xc] sm:$0xf]
  %v778 = vld [vmem:[%s3 + $0x10] sm:$0xf]
  %v779 = vld [vmem:[%s3 + $0x14] sm:$0xf]
  %v780 = vld [vmem:[%s3 + $0x18] sm:$0xf]
  %v781 = vld [vmem:[%s3 + $0x1c] sm:$0xf]
  %v782 = vld [vmem:[%s3 + $0x20] sm:$0xf]
  %v783 = vld [vmem:[%s3 + $0x24] sm:$0xf]
  %v784 = vld [vmem:[%s3 + $0x28] sm:$0xf]
  %v785 = vld [vmem:[%s3 + $0x2c] sm:$0xf]
  %v786 = vld [vmem:[%s3 + $0x30] sm:$0xf]
  %v787 = vld [vmem:[%s3 + $0x34] sm:$0xf]
  %v788 = vld [vmem:[%s3 + $0x38] sm:$0xf]
  %v789 = vld [vmem:[%s3 + $0x3c] sm:$0xf]
  %v790 = vld [vmem:[%s4] sm:$0x1]
  %v792 = vlaneseq
  %v793 = vshrl.u32 %v792, 7
  %v794 = vsub.s32 0, %v793
  %v795 = vrot.slane %v790, %v794
  %v813 = vunpack.c.l.b16 %v774
  %v814 = vunpack.c.l.b16 %v775
  %v815 = vunpack.c.l.b16 %v776
  %v816 = vunpack.c.l.b16 %v777
  %v817 = vunpack.c.l.b16 %v778
  %v818 = vunpack.c.l.b16 %v779
  %v819 = vunpack.c.l.b16 %v780
  %v820 = vunpack.c.l.b16 %v781
  %v821 = vunpack.c.l.b16 %v782
  %v822 = vunpack.c.l.b16 %v783
  %v823 = vunpack.c.l.b16 %v784
  %v824 = vunpack.c.l.b16 %v785
  %v825 = vunpack.c.l.b16 %v786
  %v826 = vunpack.c.l.b16 %v787
  %v827 = vunpack.c.l.b16 %v788
  %v828 = vunpack.c.l.b16 %v789
  %v829 = vpack.c.b16 %v814, %v813
  %v830 = vpack.c.b16 %v816, %v815
  %v831 = vpack.c.b16 %v818, %v817
  %v832 = vpack.c.b16 %v820, %v819
  %v833 = vpack.c.b16 %v822, %v821
  %v834 = vpack.c.b16 %v824, %v823
  %v835 = vpack.c.b16 %v826, %v825
  %v836 = vpack.c.b16 %v828, %v827
  %845 = vmatprep.subr.bf16.mxu0 0
  %846 = vmatpush1.bf16.msra.mxu0 %v836
  %847 = vmatprep.subr.bf16.mxu0 0
  %848 = vmatpush1.bf16.msra.mxu0 %v835
  %849 = vmatprep.subr.bf16.mxu0 0
  %850 = vmatpush1.bf16.msra.mxu0 %v834
  %851 = vmatprep.subr.bf16.mxu0 0
  %852 = vmatpush1.bf16.msra.mxu0 %v833
  %853 = vmatprep.subr.bf16.mxu0 0
  %854 = vmatpush1.bf16.msra.mxu0 %v832
  %855 = vmatprep.subr.bf16.mxu0 0
  %856 = vmatpush1.bf16.msra.mxu0 %v831
  %857 = vmatprep.subr.bf16.mxu0 0
  %858 = vmatpush1.bf16.msra.mxu0 %v830
  %859 = vmatprep.subr.bf16.mxu0 0
  %860 = vmatpush1.bf16.msra.mxu0 %v829
  %861 = vmatprep.subr.bf16.mxu0 0
  %862 = vmatpush2.bf16.msra.mxu0 0
  %863 = vmatprep.subr.bf16.mxu0 0
  %864 = vmatpush2.bf16.msra.mxu0 0
  %865 = vmatprep.subr.bf16.mxu0 0
  %866 = vmatpush2.bf16.msra.mxu0 0
  %867 = vmatprep.subr.bf16.mxu0 0
  %868 = vmatpush2.bf16.msra.mxu0 0
  %869 = vmatprep.subr.bf16.mxu0 0
  %870 = vmatpush2.bf16.msra.mxu0 0
  %871 = vmatprep.subr.bf16.mxu0 0
  %872 = vmatpush2.bf16.msra.mxu0 0
  %873 = vmatprep.subr.bf16.mxu0 0
  %874 = vmatpush2.bf16.msra.mxu0 0
  %875 = vmatprep.subr.bf16.mxu0 0
  %876 = vmatpush2.bf16.msra.mxu0 0
  %877 = vmatprep.mubr.bf16.mxu0 0
  %878 = vmatmul.mubr.bf16.gmra.mxu0 %v773
  %v879 = vpop.f32.mrf.mxu0
  %v880 = vadd.f32 %v795, %v879
  %v881 = vpop.f32.mrf.mxu0
  %v882 = vpop.f32.mrf.mxu0
  %v883 = vpop.f32.mrf.mxu0
  %884 = vdwg.mxu0
  %v885 = vmax.f32 %v880, 0.0
  %v886 = vpack.c.bf16 %v885, %v885
  %v887 = vld [vmem:[%s5] sm:$0xf]
  %v888 = vld [vmem:[%s5 + $0x4] sm:$0xf]
  %v889 = vld [vmem:[%s5 + $0x8] sm:$0xf]
  %v890 = vld [vmem:[%s5 + $0xc] sm:$0xf]
  %v891 = vld [vmem:[%s5 + $0x10] sm:$0xf]
  %v892 = vld [vmem:[%s5 + $0x14] sm:$0xf]
  %v893 = vld [vmem:[%s5 + $0x18] sm:$0xf]
  %v894 = vld [vmem:[%s5 + $0x1c] sm:$0xf]
  %v895 = vld [vmem:[%s5 + $0x20] sm:$0xf]
  %v896 = vld [vmem:[%s5 + $0x24] sm:$0xf]
  %v897 = vld [vmem:[%s5 + $0x28] sm:$0xf]
  %v898 = vld [vmem:[%s5 + $0x2c] sm:$0xf]
  %v899 = vld [vmem:[%s5 + $0x30] sm:$0xf]
  %v900 = vld [vmem:[%s5 + $0x34] sm:$0xf]
  %v901 = vld [vmem:[%s5 + $0x38] sm:$0xf]
  %v902 = vld [vmem:[%s5 + $0x3c] sm:$0xf]
  %v903 = vld [vmem:[%s6] sm:$0x1]
  %v905 = vlaneseq
  %v906 = vshrl.u32 %v905, 7
  %v907 = vsub.s32 0, %v906
  %v908 = vrot.slane %v903, %v907
  %v926 = vunpack.c.l.b16 %v887
  %v927 = vunpack.c.l.b16 %v888
  %v928 = vunpack.c.l.b16 %v889
  %v929 = vunpack.c.l.b16 %v890
  %v930 = vunpack.c.l.b16 %v891
  %v931 = vunpack.c.l.b16 %v892
  %v932 = vunpack.c.l.b16 %v893
  %v933 = vunpack.c.l.b16 %v894
  %v934 = vunpack.c.l.b16 %v895
  %v935 = vunpack.c.l.b16 %v896
  %v936 = vunpack.c.l.b16 %v897
  %v937 = vunpack.c.l.b16 %v898
  %v938 = vunpack.c.l.b16 %v899
  %v939 = vunpack.c.l.b16 %v900
  %v940 = vunpack.c.l.b16 %v901
  %v941 = vunpack.c.l.b16 %v902
  %v942 = vpack.c.b16 %v927, %v926
  %v943 = vpack.c.b16 %v929, %v928
  %v944 = vpack.c.b16 %v931, %v930
  %v945 = vpack.c.b16 %v933, %v932
  %v946 = vpack.c.b16 %v935, %v934
  %v947 = vpack.c.b16 %v937, %v936
  %v948 = vpack.c.b16 %v939, %v938
  %v949 = vpack.c.b16 %v941, %v940
  %958 = vmatprep.subr.bf16.mxu0 0
  %959 = vmatpush1.bf16.msra.mxu0 %v949
  %960 = vmatprep.subr.bf16.mxu0 0
  %961 = vmatpush1.bf16.msra.mxu0 %v948
  %962 = vmatprep.subr.bf16.mxu0 0
  %963 = vmatpush1.bf16.msra.mxu0 %v947
  %964 = vmatprep.subr.bf16.mxu0 0
  %965 = vmatpush1.bf16.msra.mxu0 %v946
  %966 = vmatprep.subr.bf16.mxu0 0
  %967 = vmatpush1.bf16.msra.mxu0 %v945
  %968 = vmatprep.subr.bf16.mxu0 0
  %969 = vmatpush1.bf16.msra.mxu0 %v944
  %970 = vmatprep.subr.bf16.mxu0 0
  %971 = vmatpush1.bf16.msra.mxu0 %v943
  %972 = vmatprep.subr.bf16.mxu0 0
  %973 = vmatpush1.bf16.msra.mxu0 %v942
  %974 = vmatprep.subr.bf16.mxu0 0
  %975 = vmatpush2.bf16.msra.mxu0 0
  %976 = vmatprep.subr.bf16.mxu0 0
  %977 = vmatpush2.bf16.msra.mxu0 0
  %978 = vmatprep.subr.bf16.mxu0 0
  %979 = vmatpush2.bf16.msra.mxu0 0
  %980 = vmatprep.subr.bf16.mxu0 0
  %981 = vmatpush2.bf16.msra.mxu0 0
  %982 = vmatprep.subr.bf16.mxu0 0
  %983 = vmatpush2.bf16.msra.mxu0 0
  %984 = vmatprep.subr.bf16.mxu0 0
  %985 = vmatpush2.bf16.msra.mxu0 0
  %986 = vmatprep.subr.bf16.mxu0 0
  %987 = vmatpush2.bf16.msra.mxu0 0
  %988 = vmatprep.subr.bf16.mxu0 0
  %989 = vmatpush2.bf16.msra.mxu0 0
  %990 = vmatprep.mubr.bf16.mxu0 0
  %991 = vmatmul.mubr.bf16.gmra.mxu0 %v886
  %v992 = vpop.f32.mrf.mxu0
  %v993 = vadd.f32 %v908, %v992
  %v994 = vpop.f32.mrf.mxu0
  %v995 = vpop.f32.mrf.mxu0
  %v996 = vpop.f32.mrf.mxu0
  %997 = vdwg.mxu0
  %v998 = vmax.f32 %v993, 0.0
  %v999 = vpack.c.bf16 %v998, %v998
  %v1000 = vld [vmem:[%s7] sm:$0xf]
  %v1001 = vld [vmem:[%s7 + $0x4] sm:$0xf]
  %v1002 = vld [vmem:[%s7 + $0x8] sm:$0xf]
  %v1003 = vld [vmem:[%s7 + $0xc] sm:$0xf]
  %v1004 = vld [vmem:[%s7 + $0x10] sm:$0xf]
  %v1005 = vld [vmem:[%s7 + $0x14] sm:$0xf]
  %v1006 = vld [vmem:[%s7 + $0x18] sm:$0xf]
  %v1007 = vld [vmem:[%s7 + $0x1c] sm:$0xf]
  %v1008 = vld [vmem:[%s7 + $0x20] sm:$0xf]
  %v1009 = vld [vmem:[%s7 + $0x24] sm:$0xf]
  %v1010 = vld [vmem:[%s7 + $0x28] sm:$0xf]
  %v1011 = vld [vmem:[%s7 + $0x2c] sm:$0xf]
  %v1012 = vld [vmem:[%s7 + $0x30] sm:$0xf]
  %v1013 = vld [vmem:[%s7 + $0x34] sm:$0xf]
  %v1014 = vld [vmem:[%s7 + $0x38] sm:$0xf]
  %v1015 = vld [vmem:[%s7 + $0x3c] sm:$0xf]
  %v1016 = vld [vmem:[%s8] sm:$0x1]
  %v1018 = vlaneseq
  %v1019 = vshrl.u32 %v1018, 7
  %v1020 = vsub.s32 0, %v1019
  %v1021 = vrot.slane %v1016, %v1020
  %v1039 = vunpack.c.l.b16 %v1000
  %v1040 = vunpack.c.l.b16 %v1001
  %v1041 = vunpack.c.l.b16 %v1002
  %v1042 = vunpack.c.l.b16 %v1003
  %v1043 = vunpack.c.l.b16 %v1004
  %v1044 = vunpack.c.l.b16 %v1005
  %v1045 = vunpack.c.l.b16 %v1006
  %v1046 = vunpack.c.l.b16 %v1007
  %v1047 = vunpack.c.l.b16 %v1008
  %v1048 = vunpack.c.l.b16 %v1009
  %v1049 = vunpack.c.l.b16 %v1010
  %v1050 = vunpack.c.l.b16 %v1011
  %v1051 = vunpack.c.l.b16 %v1012
  %v1052 = vunpack.c.l.b16 %v1013
  %v1053 = vunpack.c.l.b16 %v1014
  %v1054 = vunpack.c.l.b16 %v1015
  %v1055 = vpack.c.b16 %v1040, %v1039
  %v1056 = vpack.c.b16 %v1042, %v1041
  %v1057 = vpack.c.b16 %v1044, %v1043
  %v1058 = vpack.c.b16 %v1046, %v1045
  %v1059 = vpack.c.b16 %v1048, %v1047
  %v1060 = vpack.c.b16 %v1050, %v1049
  %v1061 = vpack.c.b16 %v1052, %v1051
  %v1062 = vpack.c.b16 %v1054, %v1053
  %1071 = vmatprep.subr.bf16.mxu0 0
  %1072 = vmatpush1.bf16.msra.mxu0 %v1062
  %1073 = vmatprep.subr.bf16.mxu0 0
  %1074 = vmatpush1.bf16.msra.mxu0 %v1061
  %1075 = vmatprep.subr.bf16.mxu0 0
  %1076 = vmatpush1.bf16.msra.mxu0 %v1060
  %1077 = vmatprep.subr.bf16.mxu0 0
  %1078 = vmatpush1.bf16.msra.mxu0 %v1059
  %1079 = vmatprep.subr.bf16.mxu0 0
  %1080 = vmatpush1.bf16.msra.mxu0 %v1058
  %1081 = vmatprep.subr.bf16.mxu0 0
  %1082 = vmatpush1.bf16.msra.mxu0 %v1057
  %1083 = vmatprep.subr.bf16.mxu0 0
  %1084 = vmatpush1.bf16.msra.mxu0 %v1056
  %1085 = vmatprep.subr.bf16.mxu0 0
  %1086 = vmatpush1.bf16.msra.mxu0 %v1055
  %1087 = vmatprep.subr.bf16.mxu0 0
  %1088 = vmatpush2.bf16.msra.mxu0 0
  %1089 = vmatprep.subr.bf16.mxu0 0
  %1090 = vmatpush2.bf16.msra.mxu0 0
  %1091 = vmatprep.subr.bf16.mxu0 0
  %1092 = vmatpush2.bf16.msra.mxu0 0
  %1093 = vmatprep.subr.bf16.mxu0 0
  %1094 = vmatpush2.bf16.msra.mxu0 0
  %1095 = vmatprep.subr.bf16.mxu0 0
  %1096 = vmatpush2.bf16.msra.mxu0 0
  %1097 = vmatprep.subr.bf16.mxu0 0
  %1098 = vmatpush2.bf16.msra.mxu0 0
  %1099 = vmatprep.subr.bf16.mxu0 0
  %1100 = vmatpush2.bf16.msra.mxu0 0
  %1101 = vmatprep.subr.bf16.mxu0 0
  %1102 = vmatpush2.bf16.msra.mxu0 0
  %1103 = vmatprep.mubr.bf16.mxu0 0
  %1104 = vmatmul.mubr.bf16.gmra.mxu0 %v999
  %v1105 = vpop.f32.mrf.mxu0
  %v1106 = vadd.f32 %v1021, %v1105
  %v1107 = vpop.f32.mrf.mxu0
  %v1108 = vpop.f32.mrf.mxu0
  %v1109 = vpop.f32.mrf.mxu0
  %1110 = vdwg.mxu0
  %v1111 = vmax.f32 %v1106, 0.0
  %v1112 = vpack.c.bf16 %v1111, %v1111
  %v1113 = vld [vmem:[%s9] sm:$0xf]
  %v1114 = vld [vmem:[%s9 + $0x4] sm:$0xf]
  %v1115 = vld [vmem:[%s9 + $0x8] sm:$0xf]
  %v1116 = vld [vmem:[%s9 + $0xc] sm:$0xf]
  %v1117 = vld [vmem:[%s9 + $0x10] sm:$0xf]
  %v1118 = vld [vmem:[%s9 + $0x14] sm:$0xf]
  %v1119 = vld [vmem:[%s9 + $0x18] sm:$0xf]
  %v1120 = vld [vmem:[%s9 + $0x1c] sm:$0xf]
  %v1121 = vld [vmem:[%s9 + $0x20] sm:$0xf]
  %v1122 = vld [vmem:[%s9 + $0x24] sm:$0xf]
  %v1123 = vld [vmem:[%s9 + $0x28] sm:$0xf]
  %v1124 = vld [vmem:[%s9 + $0x2c] sm:$0xf]
  %v1125 = vld [vmem:[%s9 + $0x30] sm:$0xf]
  %v1126 = vld [vmem:[%s9 + $0x34] sm:$0xf]
  %v1127 = vld [vmem:[%s9 + $0x38] sm:$0xf]
  %v1128 = vld [vmem:[%s9 + $0x3c] sm:$0xf]
  %v1129 = vld [vmem:[%s10] sm:$0x1]
  %v1131 = vlaneseq
  %v1132 = vshrl.u32 %v1131, 7
  %v1133 = vsub.s32 0, %v1132
  %v1134 = vrot.slane %v1129, %v1133
  %v1152 = vunpack.c.l.b16 %v1113
  %v1153 = vunpack.c.l.b16 %v1114
  %v1154 = vunpack.c.l.b16 %v1115
  %v1155 = vunpack.c.l.b16 %v1116
  %v1156 = vunpack.c.l.b16 %v1117
  %v1157 = vunpack.c.l.b16 %v1118
  %v1158 = vunpack.c.l.b16 %v1119
  %v1159 = vunpack.c.l.b16 %v1120
  %v1160 = vunpack.c.l.b16 %v1121
  %v1161 = vunpack.c.l.b16 %v1122
  %v1162 = vunpack.c.l.b16 %v1123
  %v1163 = vunpack.c.l.b16 %v1124
  %v1164 = vunpack.c.l.b16 %v1125
  %v1165 = vunpack.c.l.b16 %v1126
  %v1166 = vunpack.c.l.b16 %v1127
  %v1167 = vunpack.c.l.b16 %v1128
  %v1168 = vpack.c.b16 %v1153, %v1152
  %v1169 = vpack.c.b16 %v1155, %v1154
  %v1170 = vpack.c.b16 %v1157, %v1156
  %v1171 = vpack.c.b16 %v1159, %v1158
  %v1172 = vpack.c.b16 %v1161, %v1160
  %v1173 = vpack.c.b16 %v1163, %v1162
  %v1174 = vpack.c.b16 %v1165, %v1164
  %v1175 = vpack.c.b16 %v1167, %v1166
  %1184 = vmatprep.subr.bf16.mxu0 0
  %1185 = vmatpush1.bf16.msra.mxu0 %v1175
  %1186 = vmatprep.subr.bf16.mxu0 0
  %1187 = vmatpush1.bf16.msra.mxu0 %v1174
  %1188 = vmatprep.subr.bf16.mxu0 0
  %1189 = vmatpush1.bf16.msra.mxu0 %v1173
  %1190 = vmatprep.subr.bf16.mxu0 0
  %1191 = vmatpush1.bf16.msra.mxu0 %v1172
  %1192 = vmatprep.subr.bf16.mxu0 0
  %1193 = vmatpush1.bf16.msra.mxu0 %v1171
  %1194 = vmatprep.subr.bf16.mxu0 0
  %1195 = vmatpush1.bf16.msra.mxu0 %v1170
  %1196 = vmatprep.subr.bf16.mxu0 0
  %1197 = vmatpush1.bf16.msra.mxu0 %v1169
  %1198 = vmatprep.subr.bf16.mxu0 0
  %1199 = vmatpush1.bf16.msra.mxu0 %v1168
  %1200 = vmatprep.subr.bf16.mxu0 0
  %1201 = vmatpush2.bf16.msra.mxu0 0
  %1202 = vmatprep.subr.bf16.mxu0 0
  %1203 = vmatpush2.bf16.msra.mxu0 0
  %1204 = vmatprep.subr.bf16.mxu0 0
  %1205 = vmatpush2.bf16.msra.mxu0 0
  %1206 = vmatprep.subr.bf16.mxu0 0
  %1207 = vmatpush2.bf16.msra.mxu0 0
  %1208 = vmatprep.subr.bf16.mxu0 0
  %1209 = vmatpush2.bf16.msra.mxu0 0
  %1210 = vmatprep.subr.bf16.mxu0 0
  %1211 = vmatpush2.bf16.msra.mxu0 0
  %1212 = vmatprep.subr.bf16.mxu0 0
  %1213 = vmatpush2.bf16.msra.mxu0 0
  %1214 = vmatprep.subr.bf16.mxu0 0
  %1215 = vmatpush2.bf16.msra.mxu0 0
  %1216 = vmatprep.mubr.bf16.mxu0 0
  %1217 = vmatmul.mubr.bf16.gmra.mxu0 %v1112
  %v1218 = vpop.f32.mrf.mxu0
  %v1219 = vadd.f32 %v1134, %v1218
  %v1220 = vpop.f32.mrf.mxu0
  %v1221 = vpop.f32.mrf.mxu0
  %v1222 = vpop.f32.mrf.mxu0
  %1223 = vdwg.mxu0
  %v1224 = vsub.f32 0.0, %v1219
  %v1225 = vmul.f32 %v1224, 1.442695
  %v1226 = vpow.pop %v1225
  %v1227 = vadd.f32 %v1226, 1.0
  %v1228 = vrcp.pop %v1227
  %v1229 = vpack.c.bf16 %v1228, %v1228
  %1230 = vst [vmem:[%s11] sm:$0x1] %v1229
  // Predicated region
  $region46: #{neural_network_max_util_forward.1} parent=0 // pred_check
    _
  $region47: #{neural_network_max_util_forward.1} parent=0 // pred_check_branch
    %1232 = sbr.rel (0) target = $region49
  $region48: #{neural_network_max_util_forward.1} parent=0 // pred_region
    _
  $region49: #{neural_network_max_util_forward.1} parent=0 // pred_fallthru
    _
  // Predicated region
  $region50: #{neural_network_max_util_forward.1} parent=0 // pred_check
    _
  $region51: #{neural_network_max_util_forward.1} parent=0 // pred_check_branch
    %1234 = sbr.rel (0) target = $region53
  $region52: #{neural_network_max_util_forward.1} parent=0 // pred_region
    _
  $region53: #{neural_network_max_util_forward.1} parent=0 // pred_fallthru
    _

</llo_original>
